<compile_context>
chip_gen: v7x
topology: tpu7x:2x2x1
jax: 0.10.0
libtpu: 0.0.40
codegen_flags: <defaults>
</compile_context>

<pallas_src>
import math
from functools import partial

import jax
import jax.numpy as jnp
import numpy as np
from jax import lax
from jax.experimental import pallas as pl
from jax.experimental.pallas import tpu as pltpu


def _lstm_kernel(x_ref, w_ih_ref, w_hh_ref, b_ref, o_ref,
                 gbuf, act, h_sc, c_sc, *, num_layers, skip, batch):
    """One time-chunk of a multi-layer LSTM + skip connection.

    x_ref:    (Tt*Bp, H)        input chunk, time-major, batch padded to Bp
    w_ih_ref: (L, H, 4H)        fused per-layer input weights (W_ih.T, gate-scaled)
    w_hh_ref: (L, H, 4H)        fused per-layer recurrent weights (W_hh.T, gate-scaled)
    b_ref:    (L, 1, 4H)  f32   fused bias (b_ih + b_hh, gate-scaled)
    o_ref:    (Tt*Bp, H)        output chunk
    gbuf:     (Tt*Bp, 4H) f32   input-path preactivations for the current layer
    act:      (Tt*Bp, H)  cdt   current layer's output (next layer's input)
    h_sc/c_sc:(L, Bp, H)  f32   recurrent state carried across grid time-chunks
    """
    TB, H = x_ref.shape
    Tt = TB // batch
    cdt = w_ih_ref.dtype  # MXU operand dtype (f32 here; bf16 weights also supported)

    # Zero-init recurrent state only on the first time chunk.
    @pl.when(pl.program_id(0) == 0)
    def _init():
        h_sc[...] = jnp.zeros_like(h_sc)
        c_sc[...] = jnp.zeros_like(c_sc)

    for layer in range(num_layers):
        w_ih_l = w_ih_ref[layer]            # (H, 4H)   loop-invariant loads, hoisted
        w_hh_l = w_hh_ref[layer]            # (H, 4H)
        bias_l = b_ref[layer]               # (1, 4H)
        last = layer == num_layers - 1

        # ---- Pass 1: whole-chunk input-path projection, ONE MXU matmul. ----
        if layer == 0:
            xin = x_ref[...].astype(cdt)                      # (Tt*Bp, H)
        else:
            xin = act[...]                                    # (Tt*Bp, H)
        gbuf[...] = (jnp.dot(xin, w_ih_l, preferred_element_type=jnp.float32)
                     + bias_l.astype(jnp.float32))

        # ---- Pass 2: serial recurrence; h/c live in loop-carried vregs. ----
        def step(t, carry, w_hh_l=w_hh_l):
            h_prev, c_prev = carry                            # (Bp, H) f32
            off = pl.multiple_of(t * batch, batch)
            gates = gbuf[pl.ds(off, batch), :] + jnp.dot(
                h_prev.astype(cdt), w_hh_l,
                preferred_element_type=jnp.float32)           # (Bp, 4H)
            # Gate columns were pre-scaled (i/f/o by 0.5) so a single tanh over the
            # full (Bp, 4H) gives sigmoid for i/f/o and tanh for g.
            th = jnp.tanh(gates)
            sg = 0.5 * (th + 1.0)
            i_g = sg[:, 0 * H:1 * H]
            f_g = sg[:, 1 * H:2 * H]
            g_g = th[:, 2 * H:3 * H]
            o_g = sg[:, 3 * H:4 * H]
            c_new = f_g * c_prev + i_g * g_g
            h_new = o_g * jnp.tanh(c_new)
            act[pl.ds(off, batch), :] = h_new.astype(act.dtype)
            return h_new, c_new

        h_fin, c_fin = lax.fori_loop(0, Tt, step, (h_sc[layer], c_sc[layer]))
        h_sc[layer] = h_fin
        c_sc[layer] = c_fin

        if last:
            # Slab skip-add + cast + store (outside the serial loop).
            y = act[...].astype(jnp.float32)
            if skip:
                y = y + x_ref[...].astype(jnp.float32)
            o_ref[...] = y.astype(o_ref.dtype)


def streamable_lstm(x, w_ih, w_hh, b, *, num_layers=2, skip=True, time_chunk=128):
    """x: (B, C, T) conv layout.  w_ih/w_hh: (L, C, 4C) = W.T fused per layer,
    b: (L, 1, 4C) = b_ih + b_hh.  Returns (B, C, T)."""
    B, C, T = x.shape
    H = C
    G = 4 * H
    L = num_layers
    assert w_ih.shape == (L, H, G) and w_hh.shape == (L, H, G) and b.shape == (L, 1, G)

    # Pre-scale gate columns: i/f/o by 0.5 (so sigmoid(z) = 0.5*(tanh(z/2)+1) falls
    # out of one tanh), g untouched.  Applied once to the (tiny) weights.
    ones = jnp.ones((H,), jnp.float32)
    gate_scale = jnp.concatenate([0.5 * ones, 0.5 * ones, ones, 0.5 * ones])  # (4H,)
    w_ih_s = (w_ih.astype(jnp.float32) * gate_scale).astype(w_ih.dtype)
    w_hh_s = (w_hh.astype(jnp.float32) * gate_scale).astype(w_hh.dtype)
    b_s = b.astype(jnp.float32) * gate_scale

    # Pad batch to a sublane multiple (8) -> all per-step slices are aligned, and
    # pad time to a multiple of the chunk (instead of shrinking the chunk).
    Bp = max(8, ((B + 7) // 8) * 8)
    Tt = min(time_chunk, T)
    T_pad = ((T + Tt - 1) // Tt) * Tt

    x_tbc = jnp.transpose(x, (2, 0, 1))                                  # (T, B, H)
    x_pad = jnp.pad(x_tbc, ((0, T_pad - T), (0, Bp - B), (0, 0)))        # (T_pad, Bp, H)
    x2d = x_pad.reshape(T_pad * Bp, H)

    grid = (T_pad // Tt,)
    kernel = partial(_lstm_kernel, num_layers=L, skip=skip, batch=Bp)

    y2d = pl.pallas_call(
        kernel,
        out_shape=jax.ShapeDtypeStruct((T_pad * Bp, H), x.dtype),
        grid=grid,
        in_specs=[
            pl.BlockSpec((Tt * Bp, H), lambda i: (i, 0)),      # x: streamed over time
            pl.BlockSpec((L, H, G), lambda i: (0, 0, 0)),      # weights: VMEM-resident
            pl.BlockSpec((L, H, G), lambda i: (0, 0, 0)),
            pl.BlockSpec((L, 1, G), lambda i: (0, 0, 0)),
        ],
        out_specs=pl.BlockSpec((Tt * Bp, H), lambda i: (i, 0)),  # y: streamed over time
        scratch_shapes=[
            pltpu.VMEM((Tt * Bp, G), jnp.float32),     # gbuf: input-path preacts
            pltpu.VMEM((Tt * Bp, H), w_ih.dtype),      # act: current layer output
            pltpu.VMEM((L, Bp, H), jnp.float32),       # h (carried across chunks)
            pltpu.VMEM((L, Bp, H), jnp.float32),       # c (carried across chunks)
        ],
        # Serial dependence (h/c carry) across time chunks -> "arbitrary".
        compiler_params=pltpu.CompilerParams(
            dimension_semantics=("arbitrary",),
            vmem_limit_bytes=64 * 1024 * 1024),
    )(x2d, w_ih_s, w_hh_s, b_s)

    y = y2d.reshape(T_pad, Bp, H)[:T, :B]                                # (T, B, H)
    return jnp.transpose(y, (1, 2, 0))                                   # (B, C, T)


def init_lstm_params(key, dimension, num_layers, param_dtype=jnp.float32):
    """torch.nn.LSTM-style init: U(-1/sqrt(H), 1/sqrt(H)), weight_ih_l{l}: (4H, H),
    weight_hh_l{l}: (4H, H), biases (4H,), gate order i,f,g,o.
    Returns torch-layout params (for the reference) and the fused kernel layout:
    W.T per layer -> (L, H, 4H), combined bias -> (L, 1, 4H)."""
    H = dimension
    k = 1.0 / math.sqrt(H)
    torch_params = []
    keys = jax.random.split(key, num_layers * 4)
    for layer in range(num_layers):
        k0, k1, k2, k3 = keys[layer * 4: layer * 4 + 4]
        W_ih = jax.random.uniform(k0, (4 * H, H), jnp.float32, -k, k)
        W_hh = jax.random.uniform(k1, (4 * H, H), jnp.float32, -k, k)
        b_ih = jax.random.uniform(k2, (4 * H,), jnp.float32, -k, k)
        b_hh = jax.random.uniform(k3, (4 * H,), jnp.float32, -k, k)
        torch_params.append((W_ih, W_hh, b_ih, b_hh))

    w_ih_k = jnp.stack([p[0].T for p in torch_params]).astype(param_dtype)  # (L, H, 4H)
    w_hh_k = jnp.stack([p[1].T for p in torch_params]).astype(param_dtype)  # (L, H, 4H)
    b_k = jnp.stack([(p[2] + p[3]).reshape(1, 4 * H) for p in torch_params])  # (L, 1, 4H)
    return torch_params, w_ih_k, w_hh_k, b_k


def reference_streamable_lstm(x, torch_params, *, skip=True):
    """Pure-JAX reference with identical PyTorch nn.LSTM semantics."""
    B, C, T = x.shape
    H = C
    y = jnp.transpose(x, (2, 0, 1)).astype(jnp.float32)  # (T, B, H)
    x_tbc = y
    for (W_ih, W_hh, b_ih, b_hh) in torch_params:
        def step(carry, x_t):
            h, c = carry
            gates = x_t @ W_ih.T + h @ W_hh.T + b_ih + b_hh
            i = jax.nn.sigmoid(gates[:, 0 * H:1 * H])
            f = jax.nn.sigmoid(gates[:, 1 * H:2 * H])
            g = jnp.tanh(gates[:, 2 * H:3 * H])
            o = jax.nn.sigmoid(gates[:, 3 * H:4 * H])
            c = f * c + i * g
            h = o * jnp.tanh(c)
            return (h, c), h
        init = (jnp.zeros((B, H), jnp.float32), jnp.zeros((B, H), jnp.float32))
        _, y = lax.scan(step, init, y)
    if skip:
        y = y + x_tbc
    return jnp.transpose(y, (1, 2, 0)).astype(x.dtype)


if __name__ == "__main__":
    B, C, T = 2, 32, 16          # batch, dimension (channels), sequence length
    NUM_LAYERS = 2

    key = jax.random.PRNGKey(0)
    k_x, k_p = jax.random.split(key)
    x = jax.random.normal(k_x, (B, C, T), jnp.float32)

    torch_params, w_ih_k, w_hh_k, b_k = init_lstm_params(k_p, C, NUM_LAYERS)

    y = streamable_lstm(x, w_ih_k, w_hh_k, b_k, num_layers=NUM_LAYERS, skip=True)
    y = jax.block_until_ready(y)

    y_ref = jax.block_until_ready(
        reference_streamable_lstm(x, torch_params, skip=True))

    assert y.shape == (B, C, T), y.shape
    np.testing.assert_allclose(np.asarray(y), np.asarray(y_ref),
                               rtol=1e-4, atol=1e-4)
    print("KERNEL_OK")
</pallas_src>

<mosaic_0001>
module attributes {stable_mosaic.version = 11 : i64} {
  func.func @_lstm_kernel(%arg0: i32, %arg1: memref<128x32xf32, #tpu.memory_space<vmem>>, %arg2: memref<2x32x128xf32, #tpu.memory_space<vmem>>, %arg3: memref<2x32x128xf32, #tpu.memory_space<vmem>>, %arg4: memref<2x1x128xf32, #tpu.memory_space<vmem>>, %arg5: memref<128x32xf32, #tpu.memory_space<vmem>>, %arg6: memref<128x128xf32, #tpu.memory_space<vmem>>, %arg7: memref<128x32xf32, #tpu.memory_space<vmem>>, %arg8: memref<2x8x32xf32, #tpu.memory_space<vmem>>, %arg9: memref<2x8x32xf32, #tpu.memory_space<vmem>>) attributes {dimension_semantics = [#tpu.dimension_semantics<arbitrary>], iteration_bounds = array<i64: 1>, scalar_prefetch = 0 : i64, scratch_operands = 4 : i64, tpu.core_type = #tpu.core_type<tc>, window_params = [{transform_indices = @transform_0, window_bounds = array<i64: 128, 32>}, {pipeline_mode = #tpu.pipeline_mode<synchronous>, transform_indices = @transform_1, window_bounds = array<i64: 2, 32, 128>}, {pipeline_mode = #tpu.pipeline_mode<synchronous>, transform_indices = @transform_2, window_bounds = array<i64: 2, 32, 128>}, {pipeline_mode = #tpu.pipeline_mode<synchronous>, transform_indices = @transform_3, window_bounds = array<i64: 2, 1, 128>}, {transform_indices = @transform_4, window_bounds = array<i64: 128, 32>}]} {
    %c0_i32 = arith.constant 0 : i32
    %0 = arith.cmpi eq, %arg0, %c0_i32 : i32
    %1 = arith.extui %0 : i1 to i32
    %c0_i32_0 = arith.constant 0 : i32
    %2 = arith.cmpi ne, %1, %c0_i32_0 : i32
    scf.if %2 {
      %cst_62 = arith.constant 0.000000e+00 : f32
      %53 = vector.broadcast %cst_62 : f32 to vector<2x8x32xf32>
      %c0_63 = arith.constant 0 : index
      %c0_64 = arith.constant 0 : index
      %c0_65 = arith.constant 0 : index
      %54 = vector.load %arg8[%c0_63, %c0_64, %c0_65] : memref<2x8x32xf32, #tpu.memory_space<vmem>>, vector<2x8x32xf32>
      tpu.vector_store %arg8[%c0_63, %c0_64, %c0_65], %53 {strides = array<i32>} : memref<2x8x32xf32, #tpu.memory_space<vmem>>, vector<2x8x32xf32>,
      %cst_66 = arith.constant 0.000000e+00 : f32
      %55 = vector.broadcast %cst_66 : f32 to vector<2x8x32xf32>
      %c0_67 = arith.constant 0 : index
      %c0_68 = arith.constant 0 : index
      %c0_69 = arith.constant 0 : index
      %56 = vector.load %arg9[%c0_67, %c0_68, %c0_69] : memref<2x8x32xf32, #tpu.memory_space<vmem>>, vector<2x8x32xf32>
      tpu.vector_store %arg9[%c0_67, %c0_68, %c0_69], %55 {strides = array<i32>} : memref<2x8x32xf32, #tpu.memory_space<vmem>>, vector<2x8x32xf32>,
    } else {
    }
    %c0 = arith.constant 0 : index
    %c0_1 = arith.constant 0 : index
    %c0_2 = arith.constant 0 : index
    %3 = vector.load %arg2[%c0, %c0_1, %c0_2] : memref<2x32x128xf32, #tpu.memory_space<vmem>>, vector<1x32x128xf32>
    %4 = vector.shape_cast %3 : vector<1x32x128xf32> to vector<32x128xf32>
    %c0_3 = arith.constant 0 : index
    %c0_4 = arith.constant 0 : index
    %c0_5 = arith.constant 0 : index
    %5 = vector.load %arg3[%c0_3, %c0_4, %c0_5] : memref<2x32x128xf32, #tpu.memory_space<vmem>>, vector<1x32x128xf32>
    %6 = vector.shape_cast %5 : vector<1x32x128xf32> to vector<32x128xf32>
    %c0_6 = arith.constant 0 : index
    %c0_7 = arith.constant 0 : index
    %c0_8 = arith.constant 0 : index
    %7 = vector.load %arg4[%c0_6, %c0_7, %c0_8] : memref<2x1x128xf32, #tpu.memory_space<vmem>>, vector<1x1x128xf32>
    %8 = vector.shape_cast %7 : vector<1x1x128xf32> to vector<1x128xf32>
    %c0_9 = arith.constant 0 : index
    %c0_10 = arith.constant 0 : index
    %9 = vector.load %arg1[%c0_9, %c0_10] : memref<128x32xf32, #tpu.memory_space<vmem>>, vector<128x32xf32>
    %cst = arith.constant dense<0.000000e+00> : vector<128x128xf32>
    %10 = tpu.matmul %9, %4, %cst {dimension_numbers = #tpu.dot_dimension_numbers<[1], [0], [0], [1], [0, 0, 1, 1], [], []>} : vector<128x32xf32>, vector<32x128xf32>, vector<128x128xf32> -> vector<128x128xf32>
    %11 = vector.broadcast %8 : vector<1x128xf32> to vector<128x128xf32>
    %12 = arith.addf %10, %11 : vector<128x128xf32>
    %c0_11 = arith.constant 0 : index
    %c0_12 = arith.constant 0 : index
    %13 = vector.load %arg6[%c0_11, %c0_12] : memref<128x128xf32, #tpu.memory_space<vmem>>, vector<128x128xf32>
    tpu.vector_store %arg6[%c0_11, %c0_12], %12 {strides = array<i32>} : memref<128x128xf32, #tpu.memory_space<vmem>>, vector<128x128xf32>,
    %c0_13 = arith.constant 0 : index
    %c0_14 = arith.constant 0 : index
    %c0_15 = arith.constant 0 : index
    %14 = vector.load %arg8[%c0_13, %c0_14, %c0_15] : memref<2x8x32xf32, #tpu.memory_space<vmem>>, vector<1x8x32xf32>
    %15 = vector.shape_cast %14 : vector<1x8x32xf32> to vector<8x32xf32>
    %c0_16 = arith.constant 0 : index
    %c0_17 = arith.constant 0 : index
    %c0_18 = arith.constant 0 : index
    %16 = vector.load %arg9[%c0_16, %c0_17, %c0_18] : memref<2x8x32xf32, #tpu.memory_space<vmem>>, vector<1x8x32xf32>
    %17 = vector.shape_cast %16 : vector<1x8x32xf32> to vector<8x32xf32>
    %c0_i32_19 = arith.constant 0 : i32
    %c16_i32 = arith.constant 16 : i32
    %18 = arith.addi %c0_i32_19, %c16_i32 : i32
    %c1_i32 = arith.constant 1 : i32
    %19:2 = scf.for %arg10 = %c0_i32_19 to %18 step %c1_i32 iter_args(%arg11 = %15, %arg12 = %17) -> (vector<8x32xf32>, vector<8x32xf32>)  : i32 {
      %c8_i32 = arith.constant 8 : i32
      %53 = arith.muli %arg10, %c8_i32 : i32
      %54 = tpu.assume_multiple %53, 8 : i32
      %55 = arith.index_cast %54 : i32 to index
      %c0_62 = arith.constant 0 : index
      %56 = vector.load %arg6[%55, %c0_62] : memref<128x128xf32, #tpu.memory_space<vmem>>, vector<8x128xf32>
      %cst_63 = arith.constant dense<0.000000e+00> : vector<8x128xf32>
      %57 = tpu.matmul %arg11, %6, %cst_63 {dimension_numbers = #tpu.dot_dimension_numbers<[1], [0], [0], [1], [0, 0, 1, 1], [], []>} : vector<8x32xf32>, vector<32x128xf32>, vector<8x128xf32> -> vector<8x128xf32>
      %58 = arith.addf %56, %57 : vector<8x128xf32>
      %59 = math.tanh %58 : vector<8x128xf32>
      %cst_64 = arith.constant 1.000000e+00 : f32
      %60 = vector.broadcast %cst_64 : f32 to vector<8x128xf32>
      %61 = arith.addf %59, %60 : vector<8x128xf32>
      %cst_65 = arith.constant 5.000000e-01 : f32
      %62 = vector.broadcast %cst_65 : f32 to vector<8x128xf32>
      %63 = arith.mulf %62, %61 : vector<8x128xf32>
      %64 = vector.extract_strided_slice %63 {offsets = [0, 0], sizes = [8, 32], strides = [1, 1]} : vector<8x128xf32> to vector<8x32xf32>
      %65 = vector.extract_strided_slice %63 {offsets = [0, 32], sizes = [8, 32], strides = [1, 1]} : vector<8x128xf32> to vector<8x32xf32>
      %66 = vector.extract_strided_slice %59 {offsets = [0, 64], sizes = [8, 32], strides = [1, 1]} : vector<8x128xf32> to vector<8x32xf32>
      %67 = vector.extract_strided_slice %63 {offsets = [0, 96], sizes = [8, 32], strides = [1, 1]} : vector<8x128xf32> to vector<8x32xf32>
      %68 = arith.mulf %65, %arg12 : vector<8x32xf32>
      %69 = arith.mulf %64, %66 : vector<8x32xf32>
      %70 = arith.addf %68, %69 : vector<8x32xf32>
      %71 = math.tanh %70 : vector<8x32xf32>
      %72 = arith.mulf %67, %71 : vector<8x32xf32>
      %73 = arith.index_cast %54 : i32 to index
      %c0_66 = arith.constant 0 : index
      %74 = vector.load %arg7[%73, %c0_66] : memref<128x32xf32, #tpu.memory_space<vmem>>, vector<8x32xf32>
      tpu.vector_store %arg7[%73, %c0_66], %72 {strides = array<i32>} : memref<128x32xf32, #tpu.memory_space<vmem>>, vector<8x32xf32>,
      scf.yield %72, %70 : vector<8x32xf32>, vector<8x32xf32>
    }
    %c16_i32_20 = arith.constant 16 : i32
    %c0_21 = arith.constant 0 : index
    %c0_22 = arith.constant 0 : index
    %c0_23 = arith.constant 0 : index
    %20 = vector.load %arg8[%c0_21, %c0_22, %c0_23] : memref<2x8x32xf32, #tpu.memory_space<vmem>>, vector<1x8x32xf32>
    %21 = vector.shape_cast %20 : vector<1x8x32xf32> to vector<8x32xf32>
    %22 = vector.shape_cast %19#0 : vector<8x32xf32> to vector<1x8x32xf32>
    tpu.vector_store %arg8[%c0_21, %c0_22, %c0_23], %22 {strides = array<i32>} : memref<2x8x32xf32, #tpu.memory_space<vmem>>, vector<1x8x32xf32>,
    %c0_24 = arith.constant 0 : index
    %c0_25 = arith.constant 0 : index
    %c0_26 = arith.constant 0 : index
    %23 = vector.load %arg9[%c0_24, %c0_25, %c0_26] : memref<2x8x32xf32, #tpu.memory_space<vmem>>, vector<1x8x32xf32>
    %24 = vector.shape_cast %23 : vector<1x8x32xf32> to vector<8x32xf32>
    %25 = vector.shape_cast %19#1 : vector<8x32xf32> to vector<1x8x32xf32>
    tpu.vector_store %arg9[%c0_24, %c0_25, %c0_26], %25 {strides = array<i32>} : memref<2x8x32xf32, #tpu.memory_space<vmem>>, vector<1x8x32xf32>,
    %c1 = arith.constant 1 : index
    %c0_27 = arith.constant 0 : index
    %c0_28 = arith.constant 0 : index
    %26 = vector.load %arg2[%c1, %c0_27, %c0_28] : memref<2x32x128xf32, #tpu.memory_space<vmem>>, vector<1x32x128xf32>
    %27 = vector.shape_cast %26 : vector<1x32x128xf32> to vector<32x128xf32>
    %c1_29 = arith.constant 1 : index
    %c0_30 = arith.constant 0 : index
    %c0_31 = arith.constant 0 : index
    %28 = vector.load %arg3[%c1_29, %c0_30, %c0_31] : memref<2x32x128xf32, #tpu.memory_space<vmem>>, vector<1x32x128xf32>
    %29 = vector.shape_cast %28 : vector<1x32x128xf32> to vector<32x128xf32>
    %c1_32 = arith.constant 1 : index
    %c0_33 = arith.constant 0 : index
    %c0_34 = arith.constant 0 : index
    %30 = vector.load %arg4[%c1_32, %c0_33, %c0_34] : memref<2x1x128xf32, #tpu.memory_space<vmem>>, vector<1x1x128xf32>
    %31 = vector.shape_cast %30 : vector<1x1x128xf32> to vector<1x128xf32>
    %c0_35 = arith.constant 0 : index
    %c0_36 = arith.constant 0 : index
    %32 = vector.load %arg7[%c0_35, %c0_36] : memref<128x32xf32, #tpu.memory_space<vmem>>, vector<128x32xf32>
    %cst_37 = arith.constant dense<0.000000e+00> : vector<128x128xf32>
    %33 = tpu.matmul %32, %27, %cst_37 {dimension_numbers = #tpu.dot_dimension_numbers<[1], [0], [0], [1], [0, 0, 1, 1], [], []>} : vector<128x32xf32>, vector<32x128xf32>, vector<128x128xf32> -> vector<128x128xf32>
    %34 = vector.broadcast %31 : vector<1x128xf32> to vector<128x128xf32>
    %35 = arith.addf %33, %34 : vector<128x128xf32>
    %c0_38 = arith.constant 0 : index
    %c0_39 = arith.constant 0 : index
    %36 = vector.load %arg6[%c0_38, %c0_39] : memref<128x128xf32, #tpu.memory_space<vmem>>, vector<128x128xf32>
    tpu.vector_store %arg6[%c0_38, %c0_39], %35 {strides = array<i32>} : memref<128x128xf32, #tpu.memory_space<vmem>>, vector<128x128xf32>,
    %c1_40 = arith.constant 1 : index
    %c0_41 = arith.constant 0 : index
    %c0_42 = arith.constant 0 : index
    %37 = vector.load %arg8[%c1_40, %c0_41, %c0_42] : memref<2x8x32xf32, #tpu.memory_space<vmem>>, vector<1x8x32xf32>
    %38 = vector.shape_cast %37 : vector<1x8x32xf32> to vector<8x32xf32>
    %c1_43 = arith.constant 1 : index
    %c0_44 = arith.constant 0 : index
    %c0_45 = arith.constant 0 : index
    %39 = vector.load %arg9[%c1_43, %c0_44, %c0_45] : memref<2x8x32xf32, #tpu.memory_space<vmem>>, vector<1x8x32xf32>
    %40 = vector.shape_cast %39 : vector<1x8x32xf32> to vector<8x32xf32>
    %c0_i32_46 = arith.constant 0 : i32
    %c16_i32_47 = arith.constant 16 : i32
    %41 = arith.addi %c0_i32_46, %c16_i32_47 : i32
    %c1_i32_48 = arith.constant 1 : i32
    %42:2 = scf.for %arg10 = %c0_i32_46 to %41 step %c1_i32_48 iter_args(%arg11 = %38, %arg12 = %40) -> (vector<8x32xf32>, vector<8x32xf32>)  : i32 {
      %c8_i32 = arith.constant 8 : i32
      %53 = arith.muli %arg10, %c8_i32 : i32
      %54 = tpu.assume_multiple %53, 8 : i32
      %55 = arith.index_cast %54 : i32 to index
      %c0_62 = arith.constant 0 : index
      %56 = vector.load %arg6[%55, %c0_62] : memref<128x128xf32, #tpu.memory_space<vmem>>, vector<8x128xf32>
      %cst_63 = arith.constant dense<0.000000e+00> : vector<8x128xf32>
      %57 = tpu.matmul %arg11, %29, %cst_63 {dimension_numbers = #tpu.dot_dimension_numbers<[1], [0], [0], [1], [0, 0, 1, 1], [], []>} : vector<8x32xf32>, vector<32x128xf32>, vector<8x128xf32> -> vector<8x128xf32>
      %58 = arith.addf %56, %57 : vector<8x128xf32>
      %59 = math.tanh %58 : vector<8x128xf32>
      %cst_64 = arith.constant 1.000000e+00 : f32
      %60 = vector.broadcast %cst_64 : f32 to vector<8x128xf32>
      %61 = arith.addf %59, %60 : vector<8x128xf32>
      %cst_65 = arith.constant 5.000000e-01 : f32
      %62 = vector.broadcast %cst_65 : f32 to vector<8x128xf32>
      %63 = arith.mulf %62, %61 : vector<8x128xf32>
      %64 = vector.extract_strided_slice %63 {offsets = [0, 0], sizes = [8, 32], strides = [1, 1]} : vector<8x128xf32> to vector<8x32xf32>
      %65 = vector.extract_strided_slice %63 {offsets = [0, 32], sizes = [8, 32], strides = [1, 1]} : vector<8x128xf32> to vector<8x32xf32>
      %66 = vector.extract_strided_slice %59 {offsets = [0, 64], sizes = [8, 32], strides = [1, 1]} : vector<8x128xf32> to vector<8x32xf32>
      %67 = vector.extract_strided_slice %63 {offsets = [0, 96], sizes = [8, 32], strides = [1, 1]} : vector<8x128xf32> to vector<8x32xf32>
      %68 = arith.mulf %65, %arg12 : vector<8x32xf32>
      %69 = arith.mulf %64, %66 : vector<8x32xf32>
      %70 = arith.addf %68, %69 : vector<8x32xf32>
      %71 = math.tanh %70 : vector<8x32xf32>
      %72 = arith.mulf %67, %71 : vector<8x32xf32>
      %73 = arith.index_cast %54 : i32 to index
      %c0_66 = arith.constant 0 : index
      %74 = vector.load %arg7[%73, %c0_66] : memref<128x32xf32, #tpu.memory_space<vmem>>, vector<8x32xf32>
      tpu.vector_store %arg7[%73, %c0_66], %72 {strides = array<i32>} : memref<128x32xf32, #tpu.memory_space<vmem>>, vector<8x32xf32>,
      scf.yield %72, %70 : vector<8x32xf32>, vector<8x32xf32>
    }
    %c16_i32_49 = arith.constant 16 : i32
    %c1_50 = arith.constant 1 : index
    %c0_51 = arith.constant 0 : index
    %c0_52 = arith.constant 0 : index
    %43 = vector.load %arg8[%c1_50, %c0_51, %c0_52] : memref<2x8x32xf32, #tpu.memory_space<vmem>>, vector<1x8x32xf32>
    %44 = vector.shape_cast %43 : vector<1x8x32xf32> to vector<8x32xf32>
    %45 = vector.shape_cast %42#0 : vector<8x32xf32> to vector<1x8x32xf32>
    tpu.vector_store %arg8[%c1_50, %c0_51, %c0_52], %45 {strides = array<i32>} : memref<2x8x32xf32, #tpu.memory_space<vmem>>, vector<1x8x32xf32>,
    %c1_53 = arith.constant 1 : index
    %c0_54 = arith.constant 0 : index
    %c0_55 = arith.constant 0 : index
    %46 = vector.load %arg9[%c1_53, %c0_54, %c0_55] : memref<2x8x32xf32, #tpu.memory_space<vmem>>, vector<1x8x32xf32>
    %47 = vector.shape_cast %46 : vector<1x8x32xf32> to vector<8x32xf32>
    %48 = vector.shape_cast %42#1 : vector<8x32xf32> to vector<1x8x32xf32>
    tpu.vector_store %arg9[%c1_53, %c0_54, %c0_55], %48 {strides = array<i32>} : memref<2x8x32xf32, #tpu.memory_space<vmem>>, vector<1x8x32xf32>,
    %c0_56 = arith.constant 0 : index
    %c0_57 = arith.constant 0 : index
    %49 = vector.load %arg7[%c0_56, %c0_57] : memref<128x32xf32, #tpu.memory_space<vmem>>, vector<128x32xf32>
    %c0_58 = arith.constant 0 : index
    %c0_59 = arith.constant 0 : index
    %50 = vector.load %arg1[%c0_58, %c0_59] : memref<128x32xf32, #tpu.memory_space<vmem>>, vector<128x32xf32>
    %51 = arith.addf %49, %50 : vector<128x32xf32>
    %c0_60 = arith.constant 0 : index
    %c0_61 = arith.constant 0 : index
    %52 = vector.load %arg5[%c0_60, %c0_61] : memref<128x32xf32, #tpu.memory_space<vmem>>, vector<128x32xf32>
    tpu.vector_store %arg5[%c0_60, %c0_61], %51 {strides = array<i32>} : memref<128x32xf32, #tpu.memory_space<vmem>>, vector<128x32xf32>,
    return
  }
  func.func @transform_0(%arg0: i32) -> (i32, i32) {
    %c0_i32 = arith.constant 0 : i32
    %c0_i32_0 = arith.constant 0 : i32
    return %arg0, %c0_i32 : i32, i32
  }
  func.func @transform_1(%arg0: i32) -> (i32, i32, i32) {
    %c0_i32 = arith.constant 0 : i32
    %c0_i32_0 = arith.constant 0 : i32
    %c0_i32_1 = arith.constant 0 : i32
    %c0_i32_2 = arith.constant 0 : i32
    return %c0_i32, %c0_i32_0, %c0_i32_1 : i32, i32, i32
  }
  func.func @transform_2(%arg0: i32) -> (i32, i32, i32) {
    %c0_i32 = arith.constant 0 : i32
    %c0_i32_0 = arith.constant 0 : i32
    %c0_i32_1 = arith.constant 0 : i32
    %c0_i32_2 = arith.constant 0 : i32
    return %c0_i32, %c0_i32_0, %c0_i32_1 : i32, i32, i32
  }
  func.func @transform_3(%arg0: i32) -> (i32, i32, i32) {
    %c0_i32 = arith.constant 0 : i32
    %c0_i32_0 = arith.constant 0 : i32
    %c0_i32_1 = arith.constant 0 : i32
    %c0_i32_2 = arith.constant 0 : i32
    return %c0_i32, %c0_i32_0, %c0_i32_1 : i32, i32, i32
  }
  func.func @transform_4(%arg0: i32) -> (i32, i32) {
    %c0_i32 = arith.constant 0 : i32
    %c0_i32_0 = arith.constant 0 : i32
    return %arg0, %c0_i32 : i32, i32
  }
}

</mosaic_0001>

<llo_original>
// kernel: tpu_custom_call.1
$region0: #{tpu_custom_call.1}
  #allocation0 [shape = 'u32[]', space=smem, size = 0x4, offset = 0x4, fixed_abs, tag = 'smem constant byte address 0x4 - core index']
  #allocation1 [shape = 'u32[144,128]{1,0:T(1,128)}', space=vmem, size = 0x12000, scoped, tag = 'internal scratch']
  #allocation2 [shape = 'f32[128,128]{1,0:T(8,128)}', space=vmem, size = 0x10000, scoped, tag = 'scratch operand']
  #allocation3 [shape = 'f32[128,32]{1,0:T(8,128)}', space=vmem, size = 0x10000, scoped, tag = 'scratch operand']
  #allocation4 [shape = 'f32[2,8,32]{2,1,0:T(8,128)}', space=vmem, size = 0x2000, scoped, tag = 'scratch operand']
  #allocation5 [shape = 'f32[2,8,32]{2,1,0:T(8,128)}', space=vmem, size = 0x2000, scoped, tag = 'scratch operand']
  %s0 = inlined_call_operand.hbm [shape: f32[128,32], index: 0, kind: input, shape index: {}]
  %s1 = inlined_call_operand.hbm [shape: f32[2,32,128], index: 1, kind: input, shape index: {}]
  %s2 = inlined_call_operand.hbm [shape: f32[2,32,128], index: 2, kind: input, shape index: {}]
  %s3 = inlined_call_operand.hbm [shape: f32[2,1,128], index: 3, kind: input, shape index: {}]
  %s4 = inlined_call_operand.hbm [shape: f32[128,32], index: 4, kind: output, shape index: {}]
  %s5 = sld [smem:[#allocation0]]
  $region60: #{tpu_custom_call.1} parent=0
    _
  %s7 = ssub.s32 1, %s5
  %s8 = scalar_select 0, %s7, %s5
  $region1: #{tpu_custom_call.1} parent=0
    #allocation6 [shape = 'u8[65536]{0}', space=vmem, size = 0x10000, scoped, tag = 'input window, operand 0, single buffered']
    #allocation7 [shape = 's32[1]{0}', space=sflag, size = 0x4, scoped, tag = 'scoped memory for tpu_custom_call.1']
    #allocation8 [shape = 's32[1]{0}', space=sflag, size = 0x4, scoped, tag = 'scoped memory for tpu_custom_call.1']
    #allocation9 [shape = 'u8[32768]{0}', space=vmem, size = 0x8000, scoped, tag = 'input window, operand 1, single buffered']
    #allocation10 [shape = 's32[1]{0}', space=sflag, size = 0x4, scoped, tag = 'scoped memory for tpu_custom_call.1']
    #allocation11 [shape = 'u8[32768]{0}', space=vmem, size = 0x8000, scoped, tag = 'input window, operand 2, single buffered']
    #allocation12 [shape = 'u8[1024]{0}', space=vmem, size = 0x400, scoped, tag = 'input window, operand 3, single buffered']
    #allocation13 [shape = 's32[1]{0}', space=sflag, size = 0x4, scoped, tag = 'scoped memory for tpu_custom_call.1']
    #allocation14 [shape = 'u8[65536]{0}', space=vmem, size = 0x10000, scoped, tag = 'output window, operand 0, single buffered']
    %9 = vsyncpa [#allocation7], 0
    %10 = vsyncpa [#allocation10], 0
    %11 = vsyncpa [#allocation13], 0
    %12 = vsyncpa [#allocation8], 0
    // Predicated region
    $region2: #{tpu_custom_call.1} parent=1 // pred_check
      _
    $region3: #{tpu_custom_call.1} parent=1 // pred_check_branch
      %14 = sbr.rel (0) target = $region5
    $region4: #{tpu_custom_call.1} parent=1 // pred_region
      %s16 = ssub.s32 2048, 2048
      %17 = vsyncadd [#allocation7], %s16
      %s18 = sshll.u32 [#allocation6], 4
      %s19 = int_to_ptr.vmem [resolvable:$true] %s18
      %24 = dma.hbm_to_vmem [thread:$0]  %s0, 2048, %s19, [#allocation7], 128, 128, 8
    $region5: #{tpu_custom_call.1} parent=1 // pred_fallthru
      _
    // Predicated region
    $region6: #{tpu_custom_call.1} parent=1 // pred_check
      _
    $region7: #{tpu_custom_call.1} parent=1 // pred_check_branch
      %26 = sbr.rel (0) target = $region9
    $region8: #{tpu_custom_call.1} parent=1 // pred_region
      %s28 = ssub.s32 1024, 1024
      %29 = vsyncadd [#allocation10], %s28
      %s30 = sshll.u32 [#allocation9], 4
      %s31 = int_to_ptr.vmem [resolvable:$true] %s30
      %36 = dma.hbm_to_vmem [thread:$0]  %s1, 1024, %s31, [#allocation10], 128, 128, 8
    $region9: #{tpu_custom_call.1} parent=1 // pred_fallthru
      _
    // Predicated region
    $region10: #{tpu_custom_call.1} parent=1 // pred_check
      _
    $region11: #{tpu_custom_call.1} parent=1 // pred_check_branch
      %38 = sbr.rel (0) target = $region13
    $region12: #{tpu_custom_call.1} parent=1 // pred_region
      %s40 = ssub.s32 1024, 1024
      %41 = vsyncadd [#allocation10], %s40
      %s42 = sshll.u32 [#allocation11], 4
      %s43 = int_to_ptr.vmem [resolvable:$true] %s42
      %48 = dma.hbm_to_vmem [thread:$0]  %s2, 1024, %s43, [#allocation10], 128, 128, 8
    $region13: #{tpu_custom_call.1} parent=1 // pred_fallthru
      _
    // Predicated region
    $region14: #{tpu_custom_call.1} parent=1 // pred_check
      _
    $region15: #{tpu_custom_call.1} parent=1 // pred_check_branch
      %50 = sbr.rel (0) target = $region17
    $region16: #{tpu_custom_call.1} parent=1 // pred_region
      %s52 = ssub.s32 32, 32
      %53 = vsyncadd [#allocation13], %s52
      %s54 = sshll.u32 [#allocation12], 4
      %s55 = int_to_ptr.vmem [resolvable:$true] %s54
      %60 = dma.hbm_to_vmem [thread:$0]  %s3, 32, %s55, [#allocation13], 16, 16, 1
    $region17: #{tpu_custom_call.1} parent=1 // pred_fallthru
      _
    // Predicated region
    $region18: #{tpu_custom_call.1} parent=1 // pred_check
      _
    $region19: #{tpu_custom_call.1} parent=1 // pred_check_branch
      %62 = sbr.rel (0) target = $region21
    $region20: #{tpu_custom_call.1} parent=1 // pred_region
      %63 = dma.done [#allocation7], 2048
    $region21: #{tpu_custom_call.1} parent=1 // pred_fallthru
      _
    // Predicated region
    $region22: #{tpu_custom_call.1} parent=1 // pred_check
      _
    $region23: #{tpu_custom_call.1} parent=1 // pred_check_branch
      %65 = sbr.rel (0) target = $region25
    $region24: #{tpu_custom_call.1} parent=1 // pred_region
      %66 = dma.done [#allocation10], 1024
    $region25: #{tpu_custom_call.1} parent=1 // pred_fallthru
      _
    // Predicated region
    $region26: #{tpu_custom_call.1} parent=1 // pred_check
      _
    $region27: #{tpu_custom_call.1} parent=1 // pred_check_branch
      %68 = sbr.rel (0) target = $region29
    $region28: #{tpu_custom_call.1} parent=1 // pred_region
      %69 = dma.done [#allocation10], 1024
    $region29: #{tpu_custom_call.1} parent=1 // pred_fallthru
      _
    // Predicated region
    $region30: #{tpu_custom_call.1} parent=1 // pred_check
      _
    $region31: #{tpu_custom_call.1} parent=1 // pred_check_branch
      %71 = sbr.rel (0) target = $region33
    $region32: #{tpu_custom_call.1} parent=1 // pred_region
      %72 = dma.done [#allocation13], 32
    $region33: #{tpu_custom_call.1} parent=1 // pred_fallthru
      _
    %p73 = scmp.eq.s32.totalorder 0, 0
    // Predicated region
    $region34: #{tpu_custom_call.1} parent=1 // pred_check
      %p74 = pneg %p73
    $region35: #{tpu_custom_call.1} parent=1 // pred_check_branch
      %76 = sbr.rel (%p74) target = $region37
    $region36: #{tpu_custom_call.1} parent=1 // pred_region
      %vm77 = vcmask 261120
      %78 = vst.msk [vmem:[#allocation4] sm:$0xff] %vm77, 0.0
      %79 = vst.msk [vmem:[#allocation4 + $0x8] sm:$0xff] %vm77, 0.0
      %80 = vst.msk [vmem:[#allocation5] sm:$0xff] %vm77, 0.0
      %81 = vst.msk [vmem:[#allocation5 + $0x8] sm:$0xff] %vm77, 0.0
    $region37: #{tpu_custom_call.1} parent=1 // pred_fallthru
      _
    %v82 = vld [vmem:[#allocation9] sm:$0xff]
    %v83 = vld [vmem:[#allocation9 + $0x8] sm:$0xff]
    %v84 = vld [vmem:[#allocation9 + $0x10] sm:$0xff]
    %v85 = vld [vmem:[#allocation9 + $0x18] sm:$0xff]
    %v86 = vld [vmem:[#allocation11] sm:$0xff]
    %v87 = vld [vmem:[#allocation11 + $0x8] sm:$0xff]
    %v88 = vld [vmem:[#allocation11 + $0x10] sm:$0xff]
    %v89 = vld [vmem:[#allocation11 + $0x18] sm:$0xff]
    %v90 = vld [vmem:[#allocation12] sm:$0x1]
    %v91 = vld [vmem:[#allocation6] sm:$0xff]
    %v92 = vld [vmem:[#allocation6 + $0x8] sm:$0xff]
    %v93 = vld [vmem:[#allocation6 + $0x10] sm:$0xff]
    %v94 = vld [vmem:[#allocation6 + $0x18] sm:$0xff]
    %v95 = vld [vmem:[#allocation6 + $0x20] sm:$0xff]
    %v96 = vld [vmem:[#allocation6 + $0x28] sm:$0xff]
    %v97 = vld [vmem:[#allocation6 + $0x30] sm:$0xff]
    %v98 = vld [vmem:[#allocation6 + $0x38] sm:$0xff]
    %v99 = vld [vmem:[#allocation6 + $0x40] sm:$0xff]
    %v100 = vld [vmem:[#allocation6 + $0x48] sm:$0xff]
    %v101 = vld [vmem:[#allocation6 + $0x50] sm:$0xff]
    %v102 = vld [vmem:[#allocation6 + $0x58] sm:$0xff]
    %v103 = vld [vmem:[#allocation6 + $0x60] sm:$0xff]
    %v104 = vld [vmem:[#allocation6 + $0x68] sm:$0xff]
    %v105 = vld [vmem:[#allocation6 + $0x70] sm:$0xff]
    %v106 = vld [vmem:[#allocation6 + $0x78] sm:$0xff]
    %v108 = vlaneseq
    %v109 = vshrl.u32 %v108, 7
    %v110 = vsub.s32 0, %v109
    %v111 = vrot.slane %v90, %v110
    %vm113 = vcmask 261120
    %v115 = vsel %vm113, %v91, 0
    %v118 = vsel %vm113, %v92, 0
    %v121 = vsel %vm113, %v93, 0
    %v124 = vsel %vm113, %v94, 0
    %v127 = vsel %vm113, %v95, 0
    %v130 = vsel %vm113, %v96, 0
    %v133 = vsel %vm113, %v97, 0
    %v136 = vsel %vm113, %v98, 0
    %v139 = vsel %vm113, %v99, 0
    %v142 = vsel %vm113, %v100, 0
    %v145 = vsel %vm113, %v101, 0
    %v148 = vsel %vm113, %v102, 0
    %v151 = vsel %vm113, %v103, 0
    %v154 = vsel %vm113, %v104, 0
    %v157 = vsel %vm113, %v105, 0
    %v160 = vsel %vm113, %v106, 0
    %162 = vmatprep.subr.mxu0 0.0
    %163 = vmatpush1.msra.mxu0 %v82
    %164 = vmatprep.subr.mxu0 0.0
    %165 = vmatpush1.msra.mxu0 %v83
    %166 = vmatprep.subr.mxu0 0.0
    %167 = vmatpush1.msra.mxu0 %v84
    %168 = vmatprep.subr.mxu0 0.0
    %169 = vmatpush1.msra.mxu0 %v85
    %170 = vmatprep.subr.mxu0 0.0
    %171 = vmatpush1.msra.mxu0 0.0
    %172 = vmatprep.subr.mxu0 0.0
    %173 = vmatpush1.msra.mxu0 0.0
    %174 = vmatprep.subr.mxu0 0.0
    %175 = vmatpush1.msra.mxu0 0.0
    %176 = vmatprep.subr.mxu0 0.0
    %177 = vmatpush1.msra.mxu0 0.0
    %178 = vmatprep.subr.mxu0 0.0
    %179 = vmatpush1.msra.mxu0 0.0
    %180 = vmatprep.subr.mxu0 0.0
    %181 = vmatpush1.msra.mxu0 0.0
    %182 = vmatprep.subr.mxu0 0.0
    %183 = vmatpush1.msra.mxu0 0.0
    %184 = vmatprep.subr.mxu0 0.0
    %185 = vmatpush1.msra.mxu0 0.0
    %186 = vmatprep.subr.mxu0 0.0
    %187 = vmatpush1.msra.mxu0 0.0
    %188 = vmatprep.subr.mxu0 0.0
    %189 = vmatpush1.msra.mxu0 0.0
    %190 = vmatprep.subr.mxu0 0.0
    %191 = vmatpush1.msra.mxu0 0.0
    %192 = vmatprep.subr.mxu0 0.0
    %193 = vmatpush1.msra.mxu0 0.0
    %194 = vmatprep.subr.mxu0 0.0
    %195 = vmatpush1.msra.mxu0 0.0
    %196 = vmatprep.subr.mxu0 0.0
    %197 = vmatpush1.msra.mxu0 0.0
    %198 = vmatprep.subr.mxu0 0.0
    %199 = vmatpush1.msra.mxu0 0.0
    %200 = vmatprep.subr.mxu0 0.0
    %201 = vmatpush1.msra.mxu0 0.0
    %202 = vmatprep.subr.mxu0 0.0
    %203 = vmatpush1.msra.mxu0 0.0
    %204 = vmatprep.subr.mxu0 0.0
    %205 = vmatpush1.msra.mxu0 0.0
    %206 = vmatprep.subr.mxu0 0.0
    %207 = vmatpush1.msra.mxu0 0.0
    %208 = vmatprep.subr.mxu0 0.0
    %209 = vmatpush1.msra.mxu0 0.0
    %210 = vmatprep.subr.mxu0 0.0
    %211 = vmatpush1.msra.mxu0 0.0
    %212 = vmatprep.subr.mxu0 0.0
    %213 = vmatpush1.msra.mxu0 0.0
    %214 = vmatprep.subr.mxu0 0.0
    %215 = vmatpush1.msra.mxu0 0.0
    %216 = vmatprep.subr.mxu0 0.0
    %217 = vmatpush1.msra.mxu0 0.0
    %218 = vmatprep.subr.mxu0 0.0
    %219 = vmatpush1.msra.mxu0 0.0
    %220 = vmatprep.subr.mxu0 0.0
    %221 = vmatpush1.msra.mxu0 0.0
    %222 = vmatprep.subr.mxu0 0.0
    %223 = vmatpush1.msra.mxu0 0.0
    %224 = vmatprep.subr.mxu0 0.0
    %225 = vmatpush1.msra.mxu0 0.0
    %226 = vmatprep.mubr.f32.mxu0 0.0
    %227 = vmatmul.mubr.f32.gmra.mrb[0].mxu0 %v115
    %v228 = vpop.f32.mrb[0].mxu0
    %v229 = vadd.f32 %v111, %v228
    %v230 = vpop.f32.mrb[0].mxu0
    %231 = vmatprep.mubr.f32.mxu0 0.0
    %232 = vmatmul.mubr.f32.gmra.mrb[0].mxu0 %v118
    %v233 = vpop.f32.mrb[0].mxu0
    %v234 = vadd.f32 %v111, %v233
    %v235 = vpop.f32.mrb[0].mxu0
    %236 = vmatprep.mubr.f32.mxu0 0.0
    %237 = vmatmul.mubr.f32.gmra.mrb[0].mxu0 %v121
    %v238 = vpop.f32.mrb[0].mxu0
    %v239 = vadd.f32 %v111, %v238
    %v240 = vpop.f32.mrb[0].mxu0
    %241 = vmatprep.mubr.f32.mxu0 0.0
    %242 = vmatmul.mubr.f32.gmra.mrb[0].mxu0 %v124
    %v243 = vpop.f32.mrb[0].mxu0
    %v244 = vadd.f32 %v111, %v243
    %v245 = vpop.f32.mrb[0].mxu0
    %246 = vmatprep.mubr.f32.mxu0 0.0
    %247 = vmatmul.mubr.f32.gmra.mrb[0].mxu0 %v127
    %v248 = vpop.f32.mrb[0].mxu0
    %v249 = vadd.f32 %v111, %v248
    %v250 = vpop.f32.mrb[0].mxu0
    %251 = vmatprep.mubr.f32.mxu0 0.0
    %252 = vmatmul.mubr.f32.gmra.mrb[0].mxu0 %v130
    %v253 = vpop.f32.mrb[0].mxu0
    %v254 = vadd.f32 %v111, %v253
    %v255 = vpop.f32.mrb[0].mxu0
    %256 = vmatprep.mubr.f32.mxu0 0.0
    %257 = vmatmul.mubr.f32.gmra.mrb[0].mxu0 %v133
    %v258 = vpop.f32.mrb[0].mxu0
    %v259 = vadd.f32 %v111, %v258
    %v260 = vpop.f32.mrb[0].mxu0
    %261 = vmatprep.mubr.f32.mxu0 0.0
    %262 = vmatmul.mubr.f32.gmra.mrb[0].mxu0 %v136
    %v263 = vpop.f32.mrb[0].mxu0
    %v264 = vadd.f32 %v111, %v263
    %v265 = vpop.f32.mrb[0].mxu0
    %266 = vmatprep.mubr.f32.mxu0 0.0
    %267 = vmatmul.mubr.f32.gmra.mrb[0].mxu0 %v139
    %v268 = vpop.f32.mrb[0].mxu0
    %v269 = vadd.f32 %v111, %v268
    %v270 = vpop.f32.mrb[0].mxu0
    %271 = vmatprep.mubr.f32.mxu0 0.0
    %272 = vmatmul.mubr.f32.gmra.mrb[0].mxu0 %v142
    %v273 = vpop.f32.mrb[0].mxu0
    %v274 = vadd.f32 %v111, %v273
    %v275 = vpop.f32.mrb[0].mxu0
    %276 = vmatprep.mubr.f32.mxu0 0.0
    %277 = vmatmul.mubr.f32.gmra.mrb[0].mxu0 %v145
    %v278 = vpop.f32.mrb[0].mxu0
    %v279 = vadd.f32 %v111, %v278
    %v280 = vpop.f32.mrb[0].mxu0
    %281 = vmatprep.mubr.f32.mxu0 0.0
    %282 = vmatmul.mubr.f32.gmra.mrb[0].mxu0 %v148
    %v283 = vpop.f32.mrb[0].mxu0
    %v284 = vadd.f32 %v111, %v283
    %v285 = vpop.f32.mrb[0].mxu0
    %286 = vmatprep.mubr.f32.mxu0 0.0
    %287 = vmatmul.mubr.f32.gmra.mrb[0].mxu0 %v151
    %v288 = vpop.f32.mrb[0].mxu0
    %v289 = vadd.f32 %v111, %v288
    %v290 = vpop.f32.mrb[0].mxu0
    %291 = vmatprep.mubr.f32.mxu0 0.0
    %292 = vmatmul.mubr.f32.gmra.mrb[0].mxu0 %v154
    %v293 = vpop.f32.mrb[0].mxu0
    %v294 = vadd.f32 %v111, %v293
    %v295 = vpop.f32.mrb[0].mxu0
    %296 = vmatprep.mubr.f32.mxu0 0.0
    %297 = vmatmul.mubr.f32.gmra.mrb[0].mxu0 %v157
    %v298 = vpop.f32.mrb[0].mxu0
    %v299 = vadd.f32 %v111, %v298
    %v300 = vpop.f32.mrb[0].mxu0
    %301 = vmatprep.mubr.f32.mxu0 0.0
    %302 = vmatmul.mubr.f32.gmra.mrb[0].mxu0 %v160
    %v303 = vpop.f32.mrb[0].mxu0
    %v304 = vadd.f32 %v111, %v303
    %v305 = vpop.f32.mrb[0].mxu0
    %306 = vdwg.mxu0
    %307 = vst [vmem:[#allocation2] sm:$0xff] %v229
    %308 = vst [vmem:[#allocation2 + $0x8] sm:$0xff] %v234
    %309 = vst [vmem:[#allocation2 + $0x10] sm:$0xff] %v239
    %310 = vst [vmem:[#allocation2 + $0x18] sm:$0xff] %v244
    %311 = vst [vmem:[#allocation2 + $0x20] sm:$0xff] %v249
    %312 = vst [vmem:[#allocation2 + $0x28] sm:$0xff] %v254
    %313 = vst [vmem:[#allocation2 + $0x30] sm:$0xff] %v259
    %314 = vst [vmem:[#allocation2 + $0x38] sm:$0xff] %v264
    %315 = vst [vmem:[#allocation2 + $0x40] sm:$0xff] %v269
    %316 = vst [vmem:[#allocation2 + $0x48] sm:$0xff] %v274
    %317 = vst [vmem:[#allocation2 + $0x50] sm:$0xff] %v279
    %318 = vst [vmem:[#allocation2 + $0x58] sm:$0xff] %v284
    %319 = vst [vmem:[#allocation2 + $0x60] sm:$0xff] %v289
    %320 = vst [vmem:[#allocation2 + $0x68] sm:$0xff] %v294
    %321 = vst [vmem:[#allocation2 + $0x70] sm:$0xff] %v299
    %322 = vst [vmem:[#allocation2 + $0x78] sm:$0xff] %v304
    %v323 = vld [vmem:[#allocation4] sm:$0xff]
    %v324 = vld [vmem:[#allocation5] sm:$0xff]
    loop: start=0, step=1, limit=16
    $region38: #{tpu_custom_call.1} parent=1 // loop_pre_header
      _
    $region39: #{tpu_custom_call.1} parent=1 // loop_header
      %s326 = sphi 0, %s330
      %p327 = scmp.ge.s32.totalorder %s326, 16
      %v331 = vphi %v323, %v436
      %v332 = vphi %v324, %v442
    $region40: #{tpu_custom_call.1} parent=1 // loop_header_branch
      %329 = sbr.rel (%p327) target = $region44
    $region41: #{tpu_custom_call.1} parent=1 // loop_body
      %s333 = smul.u32 %s326, 8
      %s334 = scalar_lea.vmem [#allocation2], %s333
      %v335 = vld [vmem:[%s334] sm:$0xff]
      %v337 = vsel %vm113, %v331, 0
      %339 = vmatprep.subr.mxu0 0.0
      %340 = vmatpush1.msra.mxu0 %v86
      %341 = vmatprep.subr.mxu0 0.0
      %342 = vmatpush1.msra.mxu0 %v87
      %343 = vmatprep.subr.mxu0 0.0
      %344 = vmatpush1.msra.mxu0 %v88
      %345 = vmatprep.subr.mxu0 0.0
      %346 = vmatpush1.msra.mxu0 %v89
      %347 = vmatprep.subr.mxu0 0.0
      %348 = vmatpush1.msra.mxu0 0.0
      %349 = vmatprep.subr.mxu0 0.0
      %350 = vmatpush1.msra.mxu0 0.0
      %351 = vmatprep.subr.mxu0 0.0
      %352 = vmatpush1.msra.mxu0 0.0
      %353 = vmatprep.subr.mxu0 0.0
      %354 = vmatpush1.msra.mxu0 0.0
      %355 = vmatprep.subr.mxu0 0.0
      %356 = vmatpush1.msra.mxu0 0.0
      %357 = vmatprep.subr.mxu0 0.0
      %358 = vmatpush1.msra.mxu0 0.0
      %359 = vmatprep.subr.mxu0 0.0
      %360 = vmatpush1.msra.mxu0 0.0
      %361 = vmatprep.subr.mxu0 0.0
      %362 = vmatpush1.msra.mxu0 0.0
      %363 = vmatprep.subr.mxu0 0.0
      %364 = vmatpush1.msra.mxu0 0.0
      %365 = vmatprep.subr.mxu0 0.0
      %366 = vmatpush1.msra.mxu0 0.0
      %367 = vmatprep.subr.mxu0 0.0
      %368 = vmatpush1.msra.mxu0 0.0
      %369 = vmatprep.subr.mxu0 0.0
      %370 = vmatpush1.msra.mxu0 0.0
      %371 = vmatprep.subr.mxu0 0.0
      %372 = vmatpush1.msra.mxu0 0.0
      %373 = vmatprep.subr.mxu0 0.0
      %374 = vmatpush1.msra.mxu0 0.0
      %375 = vmatprep.subr.mxu0 0.0
      %376 = vmatpush1.msra.mxu0 0.0
      %377 = vmatprep.subr.mxu0 0.0
      %378 = vmatpush1.msra.mxu0 0.0
      %379 = vmatprep.subr.mxu0 0.0
      %380 = vmatpush1.msra.mxu0 0.0
      %381 = vmatprep.subr.mxu0 0.0
      %382 = vmatpush1.msra.mxu0 0.0
      %383 = vmatprep.subr.mxu0 0.0
      %384 = vmatpush1.msra.mxu0 0.0
      %385 = vmatprep.subr.mxu0 0.0
      %386 = vmatpush1.msra.mxu0 0.0
      %387 = vmatprep.subr.mxu0 0.0
      %388 = vmatpush1.msra.mxu0 0.0
      %389 = vmatprep.subr.mxu0 0.0
      %390 = vmatpush1.msra.mxu0 0.0
      %391 = vmatprep.subr.mxu0 0.0
      %392 = vmatpush1.msra.mxu0 0.0
      %393 = vmatprep.subr.mxu0 0.0
      %394 = vmatpush1.msra.mxu0 0.0
      %395 = vmatprep.subr.mxu0 0.0
      %396 = vmatpush1.msra.mxu0 0.0
      %397 = vmatprep.subr.mxu0 0.0
      %398 = vmatpush1.msra.mxu0 0.0
      %399 = vmatprep.subr.mxu0 0.0
      %400 = vmatpush1.msra.mxu0 0.0
      %401 = vmatprep.subr.mxu0 0.0
      %402 = vmatpush1.msra.mxu0 0.0
      %403 = vmatprep.mubr.f32.mxu0 0.0
      %404 = vmatmul.mubr.f32.gmra.mrb[0].mxu0 %v337
      %v405 = vpop.f32.mrb[0].mxu0
      %v406 = vadd.f32 0.0, %v405
      %v407 = vpop.f32.mrb[0].mxu0
      %408 = vdwg.mxu0
      %v409 = vadd.f32 %v335, %v406
      %v410 = vtanh.pop %v409
      %v411 = vadd.f32 %v410, 1.0
      %v412 = vmul.f32 %v411, 0.5
      %414 = vrot.lane.b32.xlu0 %v332, 32
      %v415 = vpop.permute.xlu0 %414
      %v417 = vmul.f32 %v412, %v415
      %419 = vrot.lane.b32.xlu0 %v410, 64
      %v420 = vpop.permute.xlu0 %419
      %v422 = vmul.f32 %v412, %v420
      %424 = vrot.lane.b32.xlu0 %v422, 32
      %v425 = vpop.permute.xlu0 %424
      %v427 = vadd.f32 %v417, %v425
      %v428 = vtanh.pop %v427
      %430 = vrot.lane.b32.xlu0 %v428, 64
      %v431 = vpop.permute.xlu0 %430
      %v433 = vmul.f32 %v412, %v431
      %435 = vrot.lane.b32.xlu0 %v433, 32
      %v436 = vpop.permute.xlu0 %435
      %s438 = scalar_lea.vmem [#allocation3], %s333
      %439 = vst.msk [vmem:[%s438] sm:$0xff] %vm113, %v436
      %441 = vrot.lane.b32.xlu0 %v427, 96
      %v442 = vpop.permute.xlu0 %441
    $region42: #{tpu_custom_call.1} parent=1 // loop_footer
      %s330 = sadd.s32 1, %s326
    $region43: #{tpu_custom_call.1} parent=1 // loop_footer_branch
      %325 = sbr.rel target = $region39
    $region44: #{tpu_custom_call.1} parent=1 // loop_exit
      _
    %444 = vst.msk [vmem:[#allocation4] sm:$0xff] %vm113, %v331
    %445 = vst.msk [vmem:[#allocation5] sm:$0xff] %vm113, %v332
    %s446 = scalar_lea.vmem [#allocation9], 32
    %v447 = vld [vmem:[%s446] sm:$0xff]
    %v448 = vld [vmem:[%s446 + $0x8] sm:$0xff]
    %v449 = vld [vmem:[%s446 + $0x10] sm:$0xff]
    %v450 = vld [vmem:[%s446 + $0x18] sm:$0xff]
    %s451 = scalar_lea.vmem [#allocation11], 32
    %v452 = vld [vmem:[%s451] sm:$0xff]
    %v453 = vld [vmem:[%s451 + $0x8] sm:$0xff]
    %v454 = vld [vmem:[%s451 + $0x10] sm:$0xff]
    %v455 = vld [vmem:[%s451 + $0x18] sm:$0xff]
    %s456 = scalar_lea.vmem [#allocation12], 1
    %v457 = vld [vmem:[%s456] sm:$0x1]
    %v458 = vld [vmem:[#allocation3] sm:$0xff]
    %v459 = vld [vmem:[#allocation3 + $0x8] sm:$0xff]
    %v460 = vld [vmem:[#allocation3 + $0x10] sm:$0xff]
    %v461 = vld [vmem:[#allocation3 + $0x18] sm:$0xff]
    %v462 = vld [vmem:[#allocation3 + $0x20] sm:$0xff]
    %v463 = vld [vmem:[#allocation3 + $0x28] sm:$0xff]
    %v464 = vld [vmem:[#allocation3 + $0x30] sm:$0xff]
    %v465 = vld [vmem:[#allocation3 + $0x38] sm:$0xff]
    %v466 = vld [vmem:[#allocation3 + $0x40] sm:$0xff]
    %v467 = vld [vmem:[#allocation3 + $0x48] sm:$0xff]
    %v468 = vld [vmem:[#allocation3 + $0x50] sm:$0xff]
    %v469 = vld [vmem:[#allocation3 + $0x58] sm:$0xff]
    %v470 = vld [vmem:[#allocation3 + $0x60] sm:$0xff]
    %v471 = vld [vmem:[#allocation3 + $0x68] sm:$0xff]
    %v472 = vld [vmem:[#allocation3 + $0x70] sm:$0xff]
    %v473 = vld [vmem:[#allocation3 + $0x78] sm:$0xff]
    %v475 = vlaneseq
    %v476 = vshrl.u32 %v475, 7
    %v477 = vsub.s32 0, %v476
    %v478 = vrot.slane %v457, %v477
    %v481 = vsel %vm113, %v458, 0
    %v484 = vsel %vm113, %v459, 0
    %v487 = vsel %vm113, %v460, 0
    %v490 = vsel %vm113, %v461, 0
    %v493 = vsel %vm113, %v462, 0
    %v496 = vsel %vm113, %v463, 0
    %v499 = vsel %vm113, %v464, 0
    %v502 = vsel %vm113, %v465, 0
    %v505 = vsel %vm113, %v466, 0
    %v508 = vsel %vm113, %v467, 0
    %v511 = vsel %vm113, %v468, 0
    %v514 = vsel %vm113, %v469, 0
    %v517 = vsel %vm113, %v470, 0
    %v520 = vsel %vm113, %v471, 0
    %v523 = vsel %vm113, %v472, 0
    %v526 = vsel %vm113, %v473, 0
    %528 = vmatprep.subr.mxu0 0.0
    %529 = vmatpush1.msra.mxu0 %v447
    %530 = vmatprep.subr.mxu0 0.0
    %531 = vmatpush1.msra.mxu0 %v448
    %532 = vmatprep.subr.mxu0 0.0
    %533 = vmatpush1.msra.mxu0 %v449
    %534 = vmatprep.subr.mxu0 0.0
    %535 = vmatpush1.msra.mxu0 %v450
    %536 = vmatprep.subr.mxu0 0.0
    %537 = vmatpush1.msra.mxu0 0.0
    %538 = vmatprep.subr.mxu0 0.0
    %539 = vmatpush1.msra.mxu0 0.0
    %540 = vmatprep.subr.mxu0 0.0
    %541 = vmatpush1.msra.mxu0 0.0
    %542 = vmatprep.subr.mxu0 0.0
    %543 = vmatpush1.msra.mxu0 0.0
    %544 = vmatprep.subr.mxu0 0.0
    %545 = vmatpush1.msra.mxu0 0.0
    %546 = vmatprep.subr.mxu0 0.0
    %547 = vmatpush1.msra.mxu0 0.0
    %548 = vmatprep.subr.mxu0 0.0
    %549 = vmatpush1.msra.mxu0 0.0
    %550 = vmatprep.subr.mxu0 0.0
    %551 = vmatpush1.msra.mxu0 0.0
    %552 = vmatprep.subr.mxu0 0.0
    %553 = vmatpush1.msra.mxu0 0.0
    %554 = vmatprep.subr.mxu0 0.0
    %555 = vmatpush1.msra.mxu0 0.0
    %556 = vmatprep.subr.mxu0 0.0
    %557 = vmatpush1.msra.mxu0 0.0
    %558 = vmatprep.subr.mxu0 0.0
    %559 = vmatpush1.msra.mxu0 0.0
    %560 = vmatprep.subr.mxu0 0.0
    %561 = vmatpush1.msra.mxu0 0.0
    %562 = vmatprep.subr.mxu0 0.0
    %563 = vmatpush1.msra.mxu0 0.0
    %564 = vmatprep.subr.mxu0 0.0
    %565 = vmatpush1.msra.mxu0 0.0
    %566 = vmatprep.subr.mxu0 0.0
    %567 = vmatpush1.msra.mxu0 0.0
    %568 = vmatprep.subr.mxu0 0.0
    %569 = vmatpush1.msra.mxu0 0.0
    %570 = vmatprep.subr.mxu0 0.0
    %571 = vmatpush1.msra.mxu0 0.0
    %572 = vmatprep.subr.mxu0 0.0
    %573 = vmatpush1.msra.mxu0 0.0
    %574 = vmatprep.subr.mxu0 0.0
    %575 = vmatpush1.msra.mxu0 0.0
    %576 = vmatprep.subr.mxu0 0.0
    %577 = vmatpush1.msra.mxu0 0.0
    %578 = vmatprep.subr.mxu0 0.0
    %579 = vmatpush1.msra.mxu0 0.0
    %580 = vmatprep.subr.mxu0 0.0
    %581 = vmatpush1.msra.mxu0 0.0
    %582 = vmatprep.subr.mxu0 0.0
    %583 = vmatpush1.msra.mxu0 0.0
    %584 = vmatprep.subr.mxu0 0.0
    %585 = vmatpush1.msra.mxu0 0.0
    %586 = vmatprep.subr.mxu0 0.0
    %587 = vmatpush1.msra.mxu0 0.0
    %588 = vmatprep.subr.mxu0 0.0
    %589 = vmatpush1.msra.mxu0 0.0
    %590 = vmatprep.subr.mxu0 0.0
    %591 = vmatpush1.msra.mxu0 0.0
    %592 = vmatprep.mubr.f32.mxu0 0.0
    %593 = vmatmul.mubr.f32.gmra.mrb[0].mxu0 %v481
    %v594 = vpop.f32.mrb[0].mxu0
    %v595 = vadd.f32 %v478, %v594
    %v596 = vpop.f32.mrb[0].mxu0
    %597 = vmatprep.mubr.f32.mxu0 0.0
    %598 = vmatmul.mubr.f32.gmra.mrb[0].mxu0 %v484
    %v599 = vpop.f32.mrb[0].mxu0
    %v600 = vadd.f32 %v478, %v599
    %v601 = vpop.f32.mrb[0].mxu0
    %602 = vmatprep.mubr.f32.mxu0 0.0
    %603 = vmatmul.mubr.f32.gmra.mrb[0].mxu0 %v487
    %v604 = vpop.f32.mrb[0].mxu0
    %v605 = vadd.f32 %v478, %v604
    %v606 = vpop.f32.mrb[0].mxu0
    %607 = vmatprep.mubr.f32.mxu0 0.0
    %608 = vmatmul.mubr.f32.gmra.mrb[0].mxu0 %v490
    %v609 = vpop.f32.mrb[0].mxu0
    %v610 = vadd.f32 %v478, %v609
    %v611 = vpop.f32.mrb[0].mxu0
    %612 = vmatprep.mubr.f32.mxu0 0.0
    %613 = vmatmul.mubr.f32.gmra.mrb[0].mxu0 %v493
    %v614 = vpop.f32.mrb[0].mxu0
    %v615 = vadd.f32 %v478, %v614
    %v616 = vpop.f32.mrb[0].mxu0
    %617 = vmatprep.mubr.f32.mxu0 0.0
    %618 = vmatmul.mubr.f32.gmra.mrb[0].mxu0 %v496
    %v619 = vpop.f32.mrb[0].mxu0
    %v620 = vadd.f32 %v478, %v619
    %v621 = vpop.f32.mrb[0].mxu0
    %622 = vmatprep.mubr.f32.mxu0 0.0
    %623 = vmatmul.mubr.f32.gmra.mrb[0].mxu0 %v499
    %v624 = vpop.f32.mrb[0].mxu0
    %v625 = vadd.f32 %v478, %v624
    %v626 = vpop.f32.mrb[0].mxu0
    %627 = vmatprep.mubr.f32.mxu0 0.0
    %628 = vmatmul.mubr.f32.gmra.mrb[0].mxu0 %v502
    %v629 = vpop.f32.mrb[0].mxu0
    %v630 = vadd.f32 %v478, %v629
    %v631 = vpop.f32.mrb[0].mxu0
    %632 = vmatprep.mubr.f32.mxu0 0.0
    %633 = vmatmul.mubr.f32.gmra.mrb[0].mxu0 %v505
    %v634 = vpop.f32.mrb[0].mxu0
    %v635 = vadd.f32 %v478, %v634
    %v636 = vpop.f32.mrb[0].mxu0
    %637 = vmatprep.mubr.f32.mxu0 0.0
    %638 = vmatmul.mubr.f32.gmra.mrb[0].mxu0 %v508
    %v639 = vpop.f32.mrb[0].mxu0
    %v640 = vadd.f32 %v478, %v639
    %v641 = vpop.f32.mrb[0].mxu0
    %642 = vmatprep.mubr.f32.mxu0 0.0
    %643 = vmatmul.mubr.f32.gmra.mrb[0].mxu0 %v511
    %v644 = vpop.f32.mrb[0].mxu0
    %v645 = vadd.f32 %v478, %v644
    %v646 = vpop.f32.mrb[0].mxu0
    %647 = vmatprep.mubr.f32.mxu0 0.0
    %648 = vmatmul.mubr.f32.gmra.mrb[0].mxu0 %v514
    %v649 = vpop.f32.mrb[0].mxu0
    %v650 = vadd.f32 %v478, %v649
    %v651 = vpop.f32.mrb[0].mxu0
    %652 = vmatprep.mubr.f32.mxu0 0.0
    %653 = vmatmul.mubr.f32.gmra.mrb[0].mxu0 %v517
    %v654 = vpop.f32.mrb[0].mxu0
    %v655 = vadd.f32 %v478, %v654
    %v656 = vpop.f32.mrb[0].mxu0
    %657 = vmatprep.mubr.f32.mxu0 0.0
    %658 = vmatmul.mubr.f32.gmra.mrb[0].mxu0 %v520
    %v659 = vpop.f32.mrb[0].mxu0
    %v660 = vadd.f32 %v478, %v659
    %v661 = vpop.f32.mrb[0].mxu0
    %662 = vmatprep.mubr.f32.mxu0 0.0
    %663 = vmatmul.mubr.f32.gmra.mrb[0].mxu0 %v523
    %v664 = vpop.f32.mrb[0].mxu0
    %v665 = vadd.f32 %v478, %v664
    %v666 = vpop.f32.mrb[0].mxu0
    %667 = vmatprep.mubr.f32.mxu0 0.0
    %668 = vmatmul.mubr.f32.gmra.mrb[0].mxu0 %v526
    %v669 = vpop.f32.mrb[0].mxu0
    %v670 = vadd.f32 %v478, %v669
    %v671 = vpop.f32.mrb[0].mxu0
    %672 = vdwg.mxu0
    %673 = vst [vmem:[#allocation2] sm:$0xff] %v595
    %674 = vst [vmem:[#allocation2 + $0x8] sm:$0xff] %v600
    %675 = vst [vmem:[#allocation2 + $0x10] sm:$0xff] %v605
    %676 = vst [vmem:[#allocation2 + $0x18] sm:$0xff] %v610
    %677 = vst [vmem:[#allocation2 + $0x20] sm:$0xff] %v615
    %678 = vst [vmem:[#allocation2 + $0x28] sm:$0xff] %v620
    %679 = vst [vmem:[#allocation2 + $0x30] sm:$0xff] %v625
    %680 = vst [vmem:[#allocation2 + $0x38] sm:$0xff] %v630
    %681 = vst [vmem:[#allocation2 + $0x40] sm:$0xff] %v635
    %682 = vst [vmem:[#allocation2 + $0x48] sm:$0xff] %v640
    %683 = vst [vmem:[#allocation2 + $0x50] sm:$0xff] %v645
    %684 = vst [vmem:[#allocation2 + $0x58] sm:$0xff] %v650
    %685 = vst [vmem:[#allocation2 + $0x60] sm:$0xff] %v655
    %686 = vst [vmem:[#allocation2 + $0x68] sm:$0xff] %v660
    %687 = vst [vmem:[#allocation2 + $0x70] sm:$0xff] %v665
    %688 = vst [vmem:[#allocation2 + $0x78] sm:$0xff] %v670
    %s689 = scalar_lea.vmem [#allocation4], 8
    %v690 = vld [vmem:[%s689] sm:$0xff]
    %s691 = scalar_lea.vmem [#allocation5], 8
    %v692 = vld [vmem:[%s691] sm:$0xff]
    loop: start=0, step=1, limit=16
    $region45: #{tpu_custom_call.1} parent=1 // loop_pre_header
      _
    $region46: #{tpu_custom_call.1} parent=1 // loop_header
      %s694 = sphi 0, %s698
      %p695 = scmp.ge.s32.totalorder %s694, 16
      %v699 = vphi %v690, %v804
      %v700 = vphi %v692, %v810
    $region47: #{tpu_custom_call.1} parent=1 // loop_header_branch
      %697 = sbr.rel (%p695) target = $region51
    $region48: #{tpu_custom_call.1} parent=1 // loop_body
      %s701 = smul.u32 %s694, 8
      %s702 = scalar_lea.vmem [#allocation2], %s701
      %v703 = vld [vmem:[%s702] sm:$0xff]
      %v705 = vsel %vm113, %v699, 0
      %707 = vmatprep.subr.mxu0 0.0
      %708 = vmatpush1.msra.mxu0 %v452
      %709 = vmatprep.subr.mxu0 0.0
      %710 = vmatpush1.msra.mxu0 %v453
      %711 = vmatprep.subr.mxu0 0.0
      %712 = vmatpush1.msra.mxu0 %v454
      %713 = vmatprep.subr.mxu0 0.0
      %714 = vmatpush1.msra.mxu0 %v455
      %715 = vmatprep.subr.mxu0 0.0
      %716 = vmatpush1.msra.mxu0 0.0
      %717 = vmatprep.subr.mxu0 0.0
      %718 = vmatpush1.msra.mxu0 0.0
      %719 = vmatprep.subr.mxu0 0.0
      %720 = vmatpush1.msra.mxu0 0.0
      %721 = vmatprep.subr.mxu0 0.0
      %722 = vmatpush1.msra.mxu0 0.0
      %723 = vmatprep.subr.mxu0 0.0
      %724 = vmatpush1.msra.mxu0 0.0
      %725 = vmatprep.subr.mxu0 0.0
      %726 = vmatpush1.msra.mxu0 0.0
      %727 = vmatprep.subr.mxu0 0.0
      %728 = vmatpush1.msra.mxu0 0.0
      %729 = vmatprep.subr.mxu0 0.0
      %730 = vmatpush1.msra.mxu0 0.0
      %731 = vmatprep.subr.mxu0 0.0
      %732 = vmatpush1.msra.mxu0 0.0
      %733 = vmatprep.subr.mxu0 0.0
      %734 = vmatpush1.msra.mxu0 0.0
      %735 = vmatprep.subr.mxu0 0.0
      %736 = vmatpush1.msra.mxu0 0.0
      %737 = vmatprep.subr.mxu0 0.0
      %738 = vmatpush1.msra.mxu0 0.0
      %739 = vmatprep.subr.mxu0 0.0
      %740 = vmatpush1.msra.mxu0 0.0
      %741 = vmatprep.subr.mxu0 0.0
      %742 = vmatpush1.msra.mxu0 0.0
      %743 = vmatprep.subr.mxu0 0.0
      %744 = vmatpush1.msra.mxu0 0.0
      %745 = vmatprep.subr.mxu0 0.0
      %746 = vmatpush1.msra.mxu0 0.0
      %747 = vmatprep.subr.mxu0 0.0
      %748 = vmatpush1.msra.mxu0 0.0
      %749 = vmatprep.subr.mxu0 0.0
      %750 = vmatpush1.msra.mxu0 0.0
      %751 = vmatprep.subr.mxu0 0.0
      %752 = vmatpush1.msra.mxu0 0.0
      %753 = vmatprep.subr.mxu0 0.0
      %754 = vmatpush1.msra.mxu0 0.0
      %755 = vmatprep.subr.mxu0 0.0
      %756 = vmatpush1.msra.mxu0 0.0
      %757 = vmatprep.subr.mxu0 0.0
      %758 = vmatpush1.msra.mxu0 0.0
      %759 = vmatprep.subr.mxu0 0.0
      %760 = vmatpush1.msra.mxu0 0.0
      %761 = vmatprep.subr.mxu0 0.0
      %762 = vmatpush1.msra.mxu0 0.0
      %763 = vmatprep.subr.mxu0 0.0
      %764 = vmatpush1.msra.mxu0 0.0
      %765 = vmatprep.subr.mxu0 0.0
      %766 = vmatpush1.msra.mxu0 0.0
      %767 = vmatprep.subr.mxu0 0.0
      %768 = vmatpush1.msra.mxu0 0.0
      %769 = vmatprep.subr.mxu0 0.0
      %770 = vmatpush1.msra.mxu0 0.0
      %771 = vmatprep.mubr.f32.mxu0 0.0
      %772 = vmatmul.mubr.f32.gmra.mrb[0].mxu0 %v705
      %v773 = vpop.f32.mrb[0].mxu0
      %v774 = vadd.f32 0.0, %v773
      %v775 = vpop.f32.mrb[0].mxu0
      %776 = vdwg.mxu0
      %v777 = vadd.f32 %v703, %v774
      %v778 = vtanh.pop %v777
      %v779 = vadd.f32 %v778, 1.0
      %v780 = vmul.f32 %v779, 0.5
      %782 = vrot.lane.b32.xlu0 %v700, 32
      %v783 = vpop.permute.xlu0 %782
      %v785 = vmul.f32 %v780, %v783
      %787 = vrot.lane.b32.xlu0 %v778, 64
      %v788 = vpop.permute.xlu0 %787
      %v790 = vmul.f32 %v780, %v788
      %792 = vrot.lane.b32.xlu0 %v790, 32
      %v793 = vpop.permute.xlu0 %792
      %v795 = vadd.f32 %v785, %v793
      %v796 = vtanh.pop %v795
      %798 = vrot.lane.b32.xlu0 %v796, 64
      %v799 = vpop.permute.xlu0 %798
      %v801 = vmul.f32 %v780, %v799
      %803 = vrot.lane.b32.xlu0 %v801, 32
      %v804 = vpop.permute.xlu0 %803
      %s806 = scalar_lea.vmem [#allocation3], %s701
      %807 = vst.msk [vmem:[%s806] sm:$0xff] %vm113, %v804
      %809 = vrot.lane.b32.xlu0 %v795, 96
      %v810 = vpop.permute.xlu0 %809
    $region49: #{tpu_custom_call.1} parent=1 // loop_footer
      %s698 = sadd.s32 1, %s694
    $region50: #{tpu_custom_call.1} parent=1 // loop_footer_branch
      %693 = sbr.rel target = $region46
    $region51: #{tpu_custom_call.1} parent=1 // loop_exit
      _
    %812 = vst.msk [vmem:[%s689] sm:$0xff] %vm113, %v699
    %813 = vst.msk [vmem:[%s691] sm:$0xff] %vm113, %v700
    %v814 = vld [vmem:[#allocation3] sm:$0xff]
    %v815 = vld [vmem:[#allocation3 + $0x8] sm:$0xff]
    %v816 = vld [vmem:[#allocation3 + $0x10] sm:$0xff]
    %v817 = vld [vmem:[#allocation3 + $0x18] sm:$0xff]
    %v818 = vld [vmem:[#allocation3 + $0x20] sm:$0xff]
    %v819 = vld [vmem:[#allocation3 + $0x28] sm:$0xff]
    %v820 = vld [vmem:[#allocation3 + $0x30] sm:$0xff]
    %v821 = vld [vmem:[#allocation3 + $0x38] sm:$0xff]
    %v822 = vld [vmem:[#allocation3 + $0x40] sm:$0xff]
    %v823 = vld [vmem:[#allocation3 + $0x48] sm:$0xff]
    %v824 = vld [vmem:[#allocation3 + $0x50] sm:$0xff]
    %v825 = vld [vmem:[#allocation3 + $0x58] sm:$0xff]
    %v826 = vld [vmem:[#allocation3 + $0x60] sm:$0xff]
    %v827 = vld [vmem:[#allocation3 + $0x68] sm:$0xff]
    %v828 = vld [vmem:[#allocation3 + $0x70] sm:$0xff]
    %v829 = vld [vmem:[#allocation3 + $0x78] sm:$0xff]
    %v830 = vld [vmem:[#allocation6] sm:$0xff]
    %v831 = vld [vmem:[#allocation6 + $0x8] sm:$0xff]
    %v832 = vld [vmem:[#allocation6 + $0x10] sm:$0xff]
    %v833 = vld [vmem:[#allocation6 + $0x18] sm:$0xff]
    %v834 = vld [vmem:[#allocation6 + $0x20] sm:$0xff]
    %v835 = vld [vmem:[#allocation6 + $0x28] sm:$0xff]
    %v836 = vld [vmem:[#allocation6 + $0x30] sm:$0xff]
    %v837 = vld [vmem:[#allocation6 + $0x38] sm:$0xff]
    %v838 = vld [vmem:[#allocation6 + $0x40] sm:$0xff]
    %v839 = vld [vmem:[#allocation6 + $0x48] sm:$0xff]
    %v840 = vld [vmem:[#allocation6 + $0x50] sm:$0xff]
    %v841 = vld [vmem:[#allocation6 + $0x58] sm:$0xff]
    %v842 = vld [vmem:[#allocation6 + $0x60] sm:$0xff]
    %v843 = vld [vmem:[#allocation6 + $0x68] sm:$0xff]
    %v844 = vld [vmem:[#allocation6 + $0x70] sm:$0xff]
    %v845 = vld [vmem:[#allocation6 + $0x78] sm:$0xff]
    %v846 = vadd.f32 %v814, %v830
    %v847 = vadd.f32 %v815, %v831
    %v848 = vadd.f32 %v816, %v832
    %v849 = vadd.f32 %v817, %v833
    %v850 = vadd.f32 %v818, %v834
    %v851 = vadd.f32 %v819, %v835
    %v852 = vadd.f32 %v820, %v836
    %v853 = vadd.f32 %v821, %v837
    %v854 = vadd.f32 %v822, %v838
    %v855 = vadd.f32 %v823, %v839
    %v856 = vadd.f32 %v824, %v840
    %v857 = vadd.f32 %v825, %v841
    %v858 = vadd.f32 %v826, %v842
    %v859 = vadd.f32 %v827, %v843
    %v860 = vadd.f32 %v828, %v844
    %v861 = vadd.f32 %v829, %v845
    %862 = vst.msk [vmem:[#allocation14] sm:$0xff] %vm113, %v846
    %863 = vst.msk [vmem:[#allocation14 + $0x8] sm:$0xff] %vm113, %v847
    %864 = vst.msk [vmem:[#allocation14 + $0x10] sm:$0xff] %vm113, %v848
    %865 = vst.msk [vmem:[#allocation14 + $0x18] sm:$0xff] %vm113, %v849
    %866 = vst.msk [vmem:[#allocation14 + $0x20] sm:$0xff] %vm113, %v850
    %867 = vst.msk [vmem:[#allocation14 + $0x28] sm:$0xff] %vm113, %v851
    %868 = vst.msk [vmem:[#allocation14 + $0x30] sm:$0xff] %vm113, %v852
    %869 = vst.msk [vmem:[#allocation14 + $0x38] sm:$0xff] %vm113, %v853
    %870 = vst.msk [vmem:[#allocation14 + $0x40] sm:$0xff] %vm113, %v854
    %871 = vst.msk [vmem:[#allocation14 + $0x48] sm:$0xff] %vm113, %v855
    %872 = vst.msk [vmem:[#allocation14 + $0x50] sm:$0xff] %vm113, %v856
    %873 = vst.msk [vmem:[#allocation14 + $0x58] sm:$0xff] %vm113, %v857
    %874 = vst.msk [vmem:[#allocation14 + $0x60] sm:$0xff] %vm113, %v858
    %875 = vst.msk [vmem:[#allocation14 + $0x68] sm:$0xff] %vm113, %v859
    %876 = vst.msk [vmem:[#allocation14 + $0x70] sm:$0xff] %vm113, %v860
    %877 = vst.msk [vmem:[#allocation14 + $0x78] sm:$0xff] %vm113, %v861
    // Predicated region
    $region52: #{tpu_custom_call.1} parent=1 // pred_check
      _
    $region53: #{tpu_custom_call.1} parent=1 // pred_check_branch
      %879 = sbr.rel (0) target = $region55
    $region54: #{tpu_custom_call.1} parent=1 // pred_region
      %s881 = ssub.s32 2048, 2048
      %882 = vsyncadd [#allocation8], %s881
      %s883 = sshll.u32 [#allocation14], 4
      %s884 = int_to_ptr.vmem [resolvable:$true] %s883
      %889 = dma.vmem_to_hbm [thread:$0]  %s884, 2048, %s4, [#allocation8], 128, 128, 8
    $region55: #{tpu_custom_call.1} parent=1 // pred_fallthru
      _
    // Predicated region
    $region56: #{tpu_custom_call.1} parent=1 // pred_check
      _
    $region57: #{tpu_custom_call.1} parent=1 // pred_check_branch
      %891 = sbr.rel (0) target = $region59
    $region58: #{tpu_custom_call.1} parent=1 // pred_region
      %892 = dma.done [#allocation8], 2048
    $region59: #{tpu_custom_call.1} parent=1 // pred_fallthru
      _
    %893 = vsyncpa [#allocation7], 1
    %894 = vsyncpa [#allocation10], 1
    %895 = vsyncpa [#allocation13], 1
    %896 = vsyncpa [#allocation8], 1

</llo_original>
